<compile_context>
chip_gen: v7x
topology: tpu7x:2x2x1
jax: 0.10.0
libtpu: 0.0.40
codegen_flags: <defaults>
</compile_context>

<pallas_src>
import itertools

import numpy as np
import jax
import jax.numpy as jnp
from jax.experimental import pallas as pl
from jax.experimental.pallas import tpu as pltpu


def _cdiv(a, b):
    return -(-a // b)


# ----------------------------------------------------------------------------
# Parameter setup (deterministic, mirrors _get_phasematrix / __get_phasevector)
# ----------------------------------------------------------------------------
def make_phasemat(n_states: int, n_phases=None, n_couplings=None):
    n_couplings = n_states * (n_states - 1) // 2 if not n_couplings else n_couplings
    n_phases = 2 ** (n_states - 1) if not n_phases else n_phases
    # All +/-1 vectors of length n_states whose first element is +1 — the same
    # set the torch module enumerates (order is irrelevant for the min).
    combos = list(itertools.product([1, -1], repeat=n_states - 1))
    phasevec = np.array([[1] + list(c) for c in combos], dtype=np.float32).T  # (n_states, n_phases)
    assert phasevec.shape == (n_states, n_phases)
    istates, jstates = np.triu_indices(n_states, k=1)
    phasemat = phasevec[istates, :] * phasevec[jstates, :]  # (n_couplings, n_phases)
    assert phasemat.shape == (n_couplings, n_phases)
    return jnp.asarray(phasemat, dtype=jnp.float32)


# ----------------------------------------------------------------------------
# Pallas kernel: stream lane-dense (G_full, C) rows once, accumulate per-column
# Sum(o^2 + t^2) and Sum(o * t) into (1, C) VMEM scratch.
# ----------------------------------------------------------------------------
def _make_kernel(n_valid_rows: int, tr: int, C: int, steps_per_core: int, need_mask: bool):
    def kernel(o_ref, t_ref, out_ref, acc_sq, acc_ot):
        c = pl.program_id(0)          # core shard ("parallel")
        i = pl.program_id(1)          # row-block step within the shard ("arbitrary")

        @pl.when(i == 0)
        def _init():
            acc_sq[...] = jnp.zeros_like(acc_sq)
            acc_ot[...] = jnp.zeros_like(acc_ot)

        def accumulate(masked):
            # Native-dtype stream, f32 math inside the kernel.
            o = o_ref[...].astype(jnp.float32)
            t = t_ref[...].astype(jnp.float32)
            if masked:
                start = (c * steps_per_core + i) * tr
                row = jax.lax.broadcasted_iota(jnp.int32, (tr, C), 0) + start
                valid = row < n_valid_rows
                o = jnp.where(valid, o, 0.0)
                t = jnp.where(valid, t, 0.0)
            # Per-step sublane reduce -> (1, C); no full-tile accumulator RMW.
            acc_sq[...] += jnp.sum(o * o + t * t, axis=0, keepdims=True)
            acc_ot[...] += jnp.sum(o * t, axis=0, keepdims=True)

        if need_mask:
            start = (c * steps_per_core + i) * tr
            overhang = start + tr > n_valid_rows   # true only on the ragged last block

            @pl.when(jnp.logical_not(overhang))
            def _fast():
                accumulate(False)

            @pl.when(overhang)
            def _masked():
                accumulate(True)
        else:
            accumulate(False)

        @pl.when(i == pl.num_programs(1) - 1)
        def _finalize():
            out_ref[0, 0:1, :] = acc_sq[...]
            out_ref[0, 1:2, :] = acc_ot[...]

    return kernel


def phys_phase_loss_atomistic(output, target, phasemat):
    """output, target: (I, J, K); phasemat: (J, L) with entries +/-1. Scalar f32 loss."""
    I, J, K = output.shape
    Jp, L = phasemat.shape
    assert J == Jp, f"Found {J} couplings, but expect {Jp}."
    JK = J * K
    N = I * J * K
    f32 = jnp.float32

    # --- lane fold: group G atoms per folded row so C is lane-dense ----------
    G = 128
    while G > 1 and G > I:
        G //= 2
    C = G * JK
    G_full = I // G                   # folded rows fed to the kernel
    R = I - G_full * G                # leftover atoms -> tiny plain-JAX sum

    o_flat = output.reshape(I, JK)
    t_flat = target.reshape(I, JK)
    o_main = o_flat[: G_full * G].reshape(G_full, C)   # contiguous reshape, no copy pass
    t_main = t_flat[: G_full * G].reshape(G_full, C)

    # --- row-tile sizing: ~8 MiB of input tiles (2 inputs x 2 pipeline bufs) --
    budget = 8 * 1024 * 1024
    tr_max = max(1, budget // (4 * C * 4))             # conservative: size as f32
    if G_full >= 8:
        tr = max(8, (min(tr_max, G_full) // 8) * 8)
    else:
        tr = G_full                                     # full-extent block (tiny inputs)
    T = _cdiv(G_full, tr)

    # --- shard row blocks across both TensorCores (v7x megacore) -------------
    # Keep T divisible by the core count so the two per-core block ranges tile
    # exactly (no clamped/duplicated blocks needed).
    NC = 1
    if T >= 2:
        while T % 2 != 0 and tr > 8:
            tr -= 8
            T = _cdiv(G_full, tr)
        if T % 2 == 0:
            NC = 2
    S = T // NC
    need_mask = (G_full % tr) != 0

    in_map = lambda c, i: (c * S + i, 0)
    kernel = _make_kernel(G_full, tr, C, S, need_mask)

    partial = pl.pallas_call(
        kernel,
        out_shape=jax.ShapeDtypeStruct((NC, 2, C), f32),   # per-core [sq; ot] columns
        grid=(NC, S),
        in_specs=[
            pl.BlockSpec((tr, C), in_map),
            pl.BlockSpec((tr, C), in_map),
        ],
        out_specs=pl.BlockSpec((1, 2, C), lambda c, i: (c, 0, 0)),
        scratch_shapes=[
            pltpu.VMEM((1, C), f32),   # acc_sq
            pltpu.VMEM((1, C), f32),   # acc_ot
        ],
        compiler_params=pltpu.CompilerParams(
            dimension_semantics=("parallel", "arbitrary"),
            vmem_limit_bytes=32 * 1024 * 1024,
        ),
    )(o_main, t_main)

    # --- tiny epilogue in plain JAX -------------------------------------------
    sq_cols = partial[:, 0, :].sum(axis=0)                  # (C,)
    ot_cols = partial[:, 1, :].sum(axis=0)                  # (C,)
    sq_total = jnp.sum(sq_cols)                             # scalar Sum(o^2 + t^2)
    c_j = ot_cols.reshape(G, J, K).sum(axis=(0, 2))         # (J,)  Sum_{i,k} o*t

    if R > 0:                                               # leftover < G atoms
        o_tail = o_flat[G_full * G:].astype(f32).reshape(R, J, K)
        t_tail = t_flat[G_full * G:].astype(f32).reshape(R, J, K)
        sq_total = sq_total + jnp.sum(o_tail * o_tail + t_tail * t_tail)
        c_j = c_j + jnp.sum(o_tail * t_tail, axis=(0, 2))

    # SSE_l = Sum(o^2+t^2) - 2 * Sum_j c_j * phasemat[j,l]  (p^2 = 1 identity)
    sse = sq_total - 2.0 * (c_j @ phasemat.astype(f32))     # (L,)
    return jnp.min(sse) / float(N)


# ----------------------------------------------------------------------------
# Pure-JAX reference (mirrors the torch forward exactly)
# ----------------------------------------------------------------------------
def ref_loss(output, target, phasemat):
    o = output.astype(jnp.float32)
    t = target.astype(jnp.float32)
    L = phasemat.shape[1]
    losses = []
    for l in range(L):
        diff = o * phasemat[None, :, l, None].astype(jnp.float32) - t
        losses.append(jnp.mean(diff * diff))
    return jnp.min(jnp.stack(losses))


if __name__ == "__main__":
    key = jax.random.PRNGKey(0)
    cases = [
        # (n_states, n_atoms, dtype)
        (3, 8, jnp.float32),       # tiny: matches the torch example scale
        (4, 1000, jnp.float32),    # medium: exercises lane fold + JAX tail
        (3, 5000, jnp.bfloat16),   # larger: 2-core split, ragged-block mask, native bf16 stream
    ]
    for n_states, I, dtype in cases:
        phasemat = make_phasemat(n_states)
        n_couplings = phasemat.shape[0]
        key, k1, k2 = jax.random.split(key, 3)
        output = jax.random.normal(k1, (I, n_couplings, 3), dtype=jnp.float32).astype(dtype)
        target = jax.random.normal(k2, (I, n_couplings, 3), dtype=jnp.float32).astype(dtype)

        loss = jax.block_until_ready(phys_phase_loss_atomistic(output, target, phasemat))
        expected = jax.block_until_ready(ref_loss(output, target, phasemat))

        rtol = 1e-3 if dtype == jnp.bfloat16 else 5e-4
        assert np.allclose(np.asarray(loss), np.asarray(expected), rtol=rtol, atol=1e-5), (
            f"n_states={n_states} I={I} dtype={dtype}: kernel={loss} ref={expected}"
        )
    print("KERNEL_OK")
</pallas_src>

<mosaic_0001>
module attributes {stable_mosaic.version = 11 : i64} {
  func.func @kernel(%arg0: i32, %arg1: i32, %arg2: memref<1x72xf32, #tpu.memory_space<vmem>>, %arg3: memref<1x72xf32, #tpu.memory_space<vmem>>, %arg4: memref<1x2x72xf32, #tpu.memory_space<vmem>>, %arg5: memref<1x72xf32, #tpu.memory_space<vmem>>, %arg6: memref<1x72xf32, #tpu.memory_space<vmem>>) attributes {dimension_semantics = [#tpu.dimension_semantics<parallel>, #tpu.dimension_semantics<arbitrary>], iteration_bounds = array<i64: 1, 1>, scalar_prefetch = 0 : i64, scratch_operands = 2 : i64, tpu.core_type = #tpu.core_type<tc>, window_params = [{transform_indices = @transform_0, window_bounds = array<i64: 1, 72>}, {transform_indices = @transform_1, window_bounds = array<i64: 1, 72>}, {transform_indices = @transform_2, window_bounds = array<i64: 1, 2, 72>}]} {
    %c0_i32 = arith.constant 0 : i32
    %0 = arith.cmpi eq, %arg1, %c0_i32 : i32
    %1 = arith.extui %0 : i1 to i32
    %c0_i32_0 = arith.constant 0 : i32
    %2 = arith.cmpi ne, %1, %c0_i32_0 : i32
    scf.if %2 {
      %cst_15 = arith.constant 0.000000e+00 : f32
      %22 = vector.broadcast %cst_15 : f32 to vector<1x72xf32>
      %c0_16 = arith.constant 0 : index
      %c0_17 = arith.constant 0 : index
      %23 = vector.load %arg5[%c0_16, %c0_17] : memref<1x72xf32, #tpu.memory_space<vmem>>, vector<1x72xf32>
      tpu.vector_store %arg5[%c0_16, %c0_17], %22 {strides = array<i32>} : memref<1x72xf32, #tpu.memory_space<vmem>>, vector<1x72xf32>,
      %cst_18 = arith.constant 0.000000e+00 : f32
      %24 = vector.broadcast %cst_18 : f32 to vector<1x72xf32>
      %c0_19 = arith.constant 0 : index
      %c0_20 = arith.constant 0 : index
      %25 = vector.load %arg6[%c0_19, %c0_20] : memref<1x72xf32, #tpu.memory_space<vmem>>, vector<1x72xf32>
      tpu.vector_store %arg6[%c0_19, %c0_20], %24 {strides = array<i32>} : memref<1x72xf32, #tpu.memory_space<vmem>>, vector<1x72xf32>,
    } else {
    }
    %c0 = arith.constant 0 : index
    %c0_1 = arith.constant 0 : index
    %3 = vector.load %arg2[%c0, %c0_1] : memref<1x72xf32, #tpu.memory_space<vmem>>, vector<1x72xf32>
    %c0_2 = arith.constant 0 : index
    %c0_3 = arith.constant 0 : index
    %4 = vector.load %arg3[%c0_2, %c0_3] : memref<1x72xf32, #tpu.memory_space<vmem>>, vector<1x72xf32>
    %c0_4 = arith.constant 0 : index
    %c0_5 = arith.constant 0 : index
    %5 = vector.load %arg5[%c0_4, %c0_5] : memref<1x72xf32, #tpu.memory_space<vmem>>, vector<1x72xf32>
    %6 = arith.mulf %3, %3 : vector<1x72xf32>
    %7 = arith.mulf %4, %4 : vector<1x72xf32>
    %8 = arith.addf %6, %7 : vector<1x72xf32>
    %cst = arith.constant dense<0.000000e+00> : vector<72xf32>
    %9 = vector.multi_reduction <add>, %8, %cst [0] : vector<1x72xf32> to vector<72xf32>
    %10 = vector.shape_cast %9 : vector<72xf32> to vector<1x72xf32>
    %11 = arith.addf %5, %10 : vector<1x72xf32>
    %c0_6 = arith.constant 0 : index
    %c0_7 = arith.constant 0 : index
    %12 = vector.load %arg5[%c0_6, %c0_7] : memref<1x72xf32, #tpu.memory_space<vmem>>, vector<1x72xf32>
    tpu.vector_store %arg5[%c0_6, %c0_7], %11 {strides = array<i32>} : memref<1x72xf32, #tpu.memory_space<vmem>>, vector<1x72xf32>,
    %c0_8 = arith.constant 0 : index
    %c0_9 = arith.constant 0 : index
    %13 = vector.load %arg6[%c0_8, %c0_9] : memref<1x72xf32, #tpu.memory_space<vmem>>, vector<1x72xf32>
    %14 = arith.mulf %3, %4 : vector<1x72xf32>
    %cst_10 = arith.constant dense<0.000000e+00> : vector<72xf32>
    %15 = vector.multi_reduction <add>, %14, %cst_10 [0] : vector<1x72xf32> to vector<72xf32>
    %16 = vector.shape_cast %15 : vector<72xf32> to vector<1x72xf32>
    %17 = arith.addf %13, %16 : vector<1x72xf32>
    %c0_11 = arith.constant 0 : index
    %c0_12 = arith.constant 0 : index
    %18 = vector.load %arg6[%c0_11, %c0_12] : memref<1x72xf32, #tpu.memory_space<vmem>>, vector<1x72xf32>
    tpu.vector_store %arg6[%c0_11, %c0_12], %17 {strides = array<i32>} : memref<1x72xf32, #tpu.memory_space<vmem>>, vector<1x72xf32>,
    %c0_i32_13 = arith.constant 0 : i32
    %19 = arith.cmpi eq, %arg1, %c0_i32_13 : i32
    %20 = arith.extui %19 : i1 to i32
    %c0_i32_14 = arith.constant 0 : i32
    %21 = arith.cmpi ne, %20, %c0_i32_14 : i32
    scf.if %21 {
      %c0_15 = arith.constant 0 : index
      %c0_16 = arith.constant 0 : index
      %22 = vector.load %arg5[%c0_15, %c0_16] : memref<1x72xf32, #tpu.memory_space<vmem>>, vector<1x72xf32>
      %c0_17 = arith.constant 0 : index
      %c0_18 = arith.constant 0 : index
      %c0_19 = arith.constant 0 : index
      %23 = vector.load %arg4[%c0_17, %c0_18, %c0_19] : memref<1x2x72xf32, #tpu.memory_space<vmem>>, vector<1x1x72xf32>
      %24 = vector.shape_cast %23 : vector<1x1x72xf32> to vector<1x72xf32>
      %25 = vector.shape_cast %22 : vector<1x72xf32> to vector<1x1x72xf32>
      tpu.vector_store %arg4[%c0_17, %c0_18, %c0_19], %25 {strides = array<i32>} : memref<1x2x72xf32, #tpu.memory_space<vmem>>, vector<1x1x72xf32>,
      %c0_20 = arith.constant 0 : index
      %c0_21 = arith.constant 0 : index
      %26 = vector.load %arg6[%c0_20, %c0_21] : memref<1x72xf32, #tpu.memory_space<vmem>>, vector<1x72xf32>
      %c0_22 = arith.constant 0 : index
      %c1 = arith.constant 1 : index
      %c0_23 = arith.constant 0 : index
      %27 = vector.load %arg4[%c0_22, %c1, %c0_23] : memref<1x2x72xf32, #tpu.memory_space<vmem>>, vector<1x1x72xf32>
      %28 = vector.shape_cast %27 : vector<1x1x72xf32> to vector<1x72xf32>
      %29 = vector.shape_cast %26 : vector<1x72xf32> to vector<1x1x72xf32>
      tpu.vector_store %arg4[%c0_22, %c1, %c0_23], %29 {strides = array<i32>} : memref<1x2x72xf32, #tpu.memory_space<vmem>>, vector<1x1x72xf32>,
    } else {
    }
    return
  }
  func.func @transform_0(%arg0: i32, %arg1: i32) -> (i32, i32) {
    %c1_i32 = arith.constant 1 : i32
    %0 = arith.muli %arg0, %c1_i32 : i32
    %1 = arith.addi %0, %arg1 : i32
    %c0_i32 = arith.constant 0 : i32
    %c0_i32_0 = arith.constant 0 : i32
    return %1, %c0_i32 : i32, i32
  }
  func.func @transform_1(%arg0: i32, %arg1: i32) -> (i32, i32) {
    %c1_i32 = arith.constant 1 : i32
    %0 = arith.muli %arg0, %c1_i32 : i32
    %1 = arith.addi %0, %arg1 : i32
    %c0_i32 = arith.constant 0 : i32
    %c0_i32_0 = arith.constant 0 : i32
    return %1, %c0_i32 : i32, i32
  }
  func.func @transform_2(%arg0: i32, %arg1: i32) -> (i32, i32, i32) {
    %c0_i32 = arith.constant 0 : i32
    %c0_i32_0 = arith.constant 0 : i32
    %c0_i32_1 = arith.constant 0 : i32
    return %arg0, %c0_i32, %c0_i32_0 : i32, i32, i32
  }
}

</mosaic_0001>

<llo_original>
// kernel: tpu_custom_call.1
$region0: #{tpu_custom_call.1}
  #allocation0 [shape = 'u32[]', space=smem, size = 0x4, offset = 0x4, fixed_abs, tag = 'smem constant byte address 0x4 - core index']
  #allocation1 [shape = 'u32[144,128]{1,0:T(1,128)}', space=vmem, size = 0x12000, scoped, tag = 'internal scratch']
  #allocation2 [shape = 'f32[1,72]{1,0:T(1,128)}', space=vmem, size = 0x200, scoped, tag = 'scratch operand']
  #allocation3 [shape = 'f32[1,72]{1,0:T(1,128)}', space=vmem, size = 0x200, scoped, tag = 'scratch operand']
  %s0 = inlined_call_operand.hbm [shape: f32[1,72], index: 0, kind: input, shape index: {}]
  %s1 = inlined_call_operand.vmem [shape: f32[1,72], index: 1, kind: input, shape index: {}]
  %s2 = inlined_call_operand.hbm [shape: f32[1,2,72], index: 2, kind: output, shape index: {}]
  %s3 = sld [smem:[#allocation0]]
  $region30: #{tpu_custom_call.1} parent=0
    _
  %s5 = ssub.s32 1, %s3
  %s6 = scalar_select 0, %s5, %s3
  $region1: #{tpu_custom_call.1} parent=0
    #allocation4 [shape = 'u8[512]{0}', space=vmem, size = 0x400, scoped, tag = 'input window, operand 0, single buffered']
    #allocation5 [shape = 's32[1]{0}', space=sflag, size = 0x4, scoped, tag = 'scoped memory for tpu_custom_call.1']
    #allocation6 [shape = 's32[1]{0}', space=sflag, size = 0x4, scoped, tag = 'scoped memory for tpu_custom_call.1']
    #allocation7 [shape = 'u8[1024]{0}', space=vmem, size = 0x400, scoped, tag = 'output window, operand 0, single buffered']
    %7 = vsyncpa [#allocation5], 0
    %8 = vsyncpa [#allocation6], 0
    // Predicated region
    $region2: #{tpu_custom_call.1} parent=1 // pred_check
      _
    $region3: #{tpu_custom_call.1} parent=1 // pred_check_branch
      %10 = sbr.rel (0) target = $region5
    $region4: #{tpu_custom_call.1} parent=1 // pred_region
      %s11 = sadd.s32 0, 0
      %s13 = ssub.s32 16, 16
      %14 = vsyncadd [#allocation5], %s13
      %s15 = smul.addr %s11, 16
      %s16 = scalar_lea.hbm %s0, %s15
      %s18 = sshll.u32 [#allocation4], 4
      %s19 = int_to_ptr.vmem [resolvable:$true] %s18
      %21 = dma.hbm_to_vmem [thread:$0]  %s16, 16, %s19, [#allocation5]
    $region5: #{tpu_custom_call.1} parent=1 // pred_fallthru
      _
    // Predicated region
    $region6: #{tpu_custom_call.1} parent=1 // pred_check
      _
    $region7: #{tpu_custom_call.1} parent=1 // pred_check_branch
      %23 = sbr.rel (0) target = $region9
    $region8: #{tpu_custom_call.1} parent=1 // pred_region
      %s24 = sadd.s32 0, 0
      %p25 = scmp.lt.s32.totalorder %s24, 0
      %s26 = scalar_select %p25, %s24, 0
      %s27 = scalar_lea.vmem %s1, %s26
      %s28 = sadd.s32 0, 0
    $region9: #{tpu_custom_call.1} parent=1 // pred_fallthru
      _
    // Predicated region
    $region10: #{tpu_custom_call.1} parent=1 // pred_check
      _
    $region11: #{tpu_custom_call.1} parent=1 // pred_check_branch
      %30 = sbr.rel (0) target = $region13
    $region12: #{tpu_custom_call.1} parent=1 // pred_region
      %31 = dma.done [#allocation5], 16
    $region13: #{tpu_custom_call.1} parent=1 // pred_fallthru
      _
    %s32 = sadd.s32 0, 0
    %p33 = scmp.lt.s32.totalorder %s32, 0
    %s34 = scalar_select %p33, %s32, 0
    %s35 = scalar_lea.vmem %s1, %s34
    %s36 = sadd.s32 0, 0
    %s37 = sadd.s32 0, 0
    %p38 = scmp.lt.s32.totalorder %s37, 0
    %s39 = scalar_select %p38, %s37, 0
    %s40 = scalar_lea.vmem %s1, %s39
    %s41 = sadd.s32 0, 0
    %p42 = scmp.eq.s32.totalorder 0, 0
    // Predicated region
    $region14: #{tpu_custom_call.1} parent=1 // pred_check
      %p43 = pneg %p42
    $region15: #{tpu_custom_call.1} parent=1 // pred_check_branch
      %45 = sbr.rel (%p43) target = $region17
    $region16: #{tpu_custom_call.1} parent=1 // pred_region
      %vm46 = vcmask 581632
      %47 = vst.msk [vmem:[#allocation2] sm:$0x1] %vm46, 0.0
      %48 = vst.msk [vmem:[#allocation3] sm:$0x1] %vm46, 0.0
    $region17: #{tpu_custom_call.1} parent=1 // pred_fallthru
      _
    %v49 = vld [vmem:[#allocation4] sm:$0x1]
    %v50 = vld [vmem:[%s40] sm:$0x1]
    %v51 = vld [vmem:[#allocation2] sm:$0x1]
    %v52 = vmul.f32 %v49, %v49
    %v53 = vmul.f32 %v50, %v50
    %v54 = vadd.f32 %v52, %v53
    %v55 = vadd.f32 %v54, 0.0
    %v56 = vadd.f32 %v51, %v55
    %vm57 = vcmask 581632
    %58 = vst.msk [vmem:[#allocation2] sm:$0x1] %vm57, %v56
    %v59 = vld [vmem:[#allocation3] sm:$0x1]
    %v60 = vmul.f32 %v49, %v50
    %v61 = vadd.f32 %v60, 0.0
    %v62 = vadd.f32 %v59, %v61
    %63 = vst.msk [vmem:[#allocation3] sm:$0x1] %vm57, %v62
    // Predicated region
    $region18: #{tpu_custom_call.1} parent=1 // pred_check
      %p64 = pneg %p42
    $region19: #{tpu_custom_call.1} parent=1 // pred_check_branch
      %66 = sbr.rel (%p64) target = $region21
    $region20: #{tpu_custom_call.1} parent=1 // pred_region
      %v67 = vld [vmem:[#allocation2] sm:$0x1]
      %68 = vst.msk [vmem:[#allocation7] sm:$0x1] %vm57, %v67
      %v69 = vld [vmem:[#allocation3] sm:$0x1]
      %70 = vst.msk [vmem:[#allocation7 + $0x1] sm:$0x1] %vm57, %v69
    $region21: #{tpu_custom_call.1} parent=1 // pred_fallthru
      _
    // Predicated region
    $region22: #{tpu_custom_call.1} parent=1 // pred_check
      _
    $region23: #{tpu_custom_call.1} parent=1 // pred_check_branch
      %72 = sbr.rel (0) target = $region25
    $region24: #{tpu_custom_call.1} parent=1 // pred_region
      %s74 = ssub.s32 32, 32
      %75 = vsyncadd [#allocation6], %s74
      %s77 = sshll.u32 [#allocation7], 4
      %s78 = int_to_ptr.vmem [resolvable:$true] %s77
      %80 = dma.vmem_to_hbm [thread:$0]  %s78, 32, %s2, [#allocation6]
    $region25: #{tpu_custom_call.1} parent=1 // pred_fallthru
      _
    // Predicated region
    $region26: #{tpu_custom_call.1} parent=1 // pred_check
      _
    $region27: #{tpu_custom_call.1} parent=1 // pred_check_branch
      %82 = sbr.rel (0) target = $region29
    $region28: #{tpu_custom_call.1} parent=1 // pred_region
      %83 = dma.done [#allocation6], 32
    $region29: #{tpu_custom_call.1} parent=1 // pred_fallthru
      _
    %84 = vsyncpa [#allocation5], 1
    %85 = vsyncpa [#allocation6], 1

</llo_original>
